<compile_context>
chip_gen: v5e
topology: v5e:2x2
jax: 0.10.0
libtpu: 0.0.40
codegen_flags: <defaults>
</compile_context>

<pallas_src>
import math

import jax
import jax.numpy as jnp
from jax import lax
from jax.experimental import pallas as pl
from jax.experimental.pallas import tpu as pltpu


def bert_embedding_kernel(ids_ref, segids_ref, pe_ref, segtab_ref, tok_hbm,
                          o_ref, tok_buf, sem):
    """One grid step = one (batch b, sequence-tile st) of TILE_S tokens.

    ids_ref    : (B*S,) int32 in SMEM (scalar prefetch) — token ids, drive row DMAs.
    segids_ref : (TILE_S, 1) int32 VMEM — segment labels of this tile (sublane-major).
    pe_ref     : (TILE_S, E) f32 VMEM — sinusoidal positional rows (streamed).
    segtab_ref : (NSEG, E) f32 VMEM — whole segment table, resident.
    tok_hbm    : (V, E) f32 raw HBM ref — token table, gathered row-by-row via DMA.
    o_ref      : (1, TILE_S, E) output tile.
    tok_buf    : (TILE_S, E) f32 VMEM scratch for the gathered token rows.
    sem        : (1,) DMA semaphore shared by all row copies of this step.
    """
    tile_s = tok_buf.shape[0]
    nseg = segtab_ref.shape[0]

    b = pl.program_id(0)
    st = pl.program_id(1)
    num_tiles = pl.num_programs(1)
    base = (b * num_tiles + st) * tile_s      # flat index of this tile's first token

    # 1) Kick off every token-row gather for this tile up front so the per-row
    #    DMA latencies overlap each other (and the VPU work below).
    def _issue(t, carry):
        row = ids_ref[base + t]
        pltpu.make_async_copy(tok_hbm.at[row], tok_buf.at[t], sem.at[0]).start()
        return carry

    lax.fori_loop(0, tile_s, _issue, 0)

    # 2) Positional + segment embedding while the gathers are in flight.
    #    The few-row segment table lives in VMEM; combine it with a select-sum
    #    instead of per-token gather DMAs.
    acc = pe_ref[...]                                       # (TILE_S, E) f32
    seg_ids = segids_ref[...]                               # (TILE_S, 1) int32
    for k in range(nseg):                                   # nseg is tiny & static
        mask = (seg_ids == k).astype(acc.dtype)             # (TILE_S, 1)
        acc = acc + mask * segtab_ref[k][None, :]           # broadcast along lanes

    # 3) Drain the token-row DMAs and add the gathered rows.
    def _wait(t, carry):
        pltpu.make_async_copy(tok_hbm.at[0], tok_buf.at[t], sem.at[0]).wait()
        return carry

    lax.fori_loop(0, tile_s, _wait, 0)
    acc = acc + tok_buf[...]

    # TODO(synk): training-mode dropout (p=0.1) would use pltpu.prng_seed +
    #             pltpu.prng_random_bits; eval semantics (identity) implemented.
    o_ref[0] = acc.astype(o_ref.dtype)


def bert_embedding(sequence, segment_label, token_table, pe_table, seg_table,
                   *, tile_s=None):
    B, S = sequence.shape
    _, E = token_table.shape
    nseg = seg_table.shape[0]

    if tile_s is None:
        tile_s = min(S, 256)
    assert S % tile_s == 0 and tile_s % 8 == 0, (
        "seq len must be a multiple of the token tile (itself a multiple of 8)")
    assert E % 128 == 0, "embed_size must be a multiple of 128 (pad the tables)"
    assert pe_table.shape[0] >= S and pe_table.shape[1] == E
    num_tiles = S // tile_s

    ids_flat = sequence.reshape(B * S).astype(jnp.int32)           # 1-D SMEM prefetch
    seg_col = segment_label.reshape(B * S, 1).astype(jnp.int32)    # (TILE_S, 1) blocks

    grid_spec = pltpu.PrefetchScalarGridSpec(
        num_scalar_prefetch=1,                 # flattened token ids into SMEM
        grid=(B, num_tiles),
        in_specs=[
            # segment labels of the tile, sublane-major so they broadcast along E
            pl.BlockSpec((tile_s, 1), lambda b, st, ids: (b * num_tiles + st, 0)),
            # positional rows: plain sequential stream, auto double-buffered
            pl.BlockSpec((tile_s, E), lambda b, st, ids: (st, 0)),
            # whole segment table resident in VMEM (only a few rows)
            pl.BlockSpec((nseg, E), lambda b, st, ids: (0, 0)),
            # token table stays in HBM; rows gathered by manual DMA in-kernel
            pl.BlockSpec(memory_space=pl.ANY),
        ],
        out_specs=pl.BlockSpec((1, tile_s, E), lambda b, st, ids: (b, st, 0)),
        scratch_shapes=[
            pltpu.VMEM((tile_s, E), token_table.dtype),
            pltpu.SemaphoreType.DMA((1,)),
        ],
    )

    return pl.pallas_call(
        bert_embedding_kernel,
        out_shape=jax.ShapeDtypeStruct((B, S, E), token_table.dtype),
        grid_spec=grid_spec,
        compiler_params=pltpu.CompilerParams(
            dimension_semantics=("parallel", "parallel")),
    )(ids_flat, seg_col, pe_table, seg_table, token_table)


def sinusoidal_pe(max_len, d_model):
    """Same construction as the PyTorch PositionalEmbedding buffer."""
    pos = jnp.arange(max_len, dtype=jnp.float32)[:, None]
    div = jnp.exp(
        jnp.arange(0, d_model, 2, dtype=jnp.float32) * -(math.log(10000.0) / d_model)
    )
    pe = jnp.zeros((max_len, d_model), jnp.float32)
    pe = pe.at[:, 0::2].set(jnp.sin(pos * div))
    pe = pe.at[:, 1::2].set(jnp.cos(pos * div))
    return pe


if __name__ == "__main__":
    # Small, forward-consistent shapes (E padded to one full lane group).
    B, S, E = 2, 16, 128
    VOCAB = 100
    N_SEGMENTS = 3      # SegmentEmbedding(3, E, padding_idx=0)
    MAX_LEN = 64        # positional buffer longer than S, only first S rows used

    key = jax.random.PRNGKey(0)
    k_tok, k_seg, k_ids, k_lbl = jax.random.split(key, 4)

    # Deterministic parameter init (nn.Embedding ~ N(0,1), padding_idx=0 zeroed).
    token_table = jax.random.normal(k_tok, (VOCAB, E), dtype=jnp.float32)
    token_table = token_table.at[0].set(0.0)
    seg_table = jax.random.normal(k_seg, (N_SEGMENTS, E), dtype=jnp.float32)
    seg_table = seg_table.at[0].set(0.0)
    pe_table = sinusoidal_pe(MAX_LEN, E)

    # Inputs.
    sequence = jax.random.randint(k_ids, (B, S), 0, VOCAB, dtype=jnp.int32)
    segment_label = jax.random.randint(k_lbl, (B, S), 0, N_SEGMENTS, dtype=jnp.int32)

    out = bert_embedding(sequence, segment_label, token_table, pe_table, seg_table,
                         tile_s=8)
    out = jax.block_until_ready(out)

    # Pure-JAX reference (eval-mode dropout == identity).
    ref = token_table[sequence] + pe_table[None, :S, :] + seg_table[segment_label]

    assert out.shape == (B, S, E), out.shape
    assert jnp.allclose(out, ref, atol=1e-5, rtol=1e-5), "mismatch vs reference"

    print("KERNEL_OK")
</pallas_src>

<mosaic_0001>
module attributes {stable_mosaic.version = 11 : i64} {
  func.func @bert_embedding_kernel(%arg0: i32, %arg1: i32, %arg2: memref<32xi32, #tpu.memory_space<smem>>, %arg3: memref<8x1xi32, #tpu.memory_space<vmem>>, %arg4: memref<8x128xf32, #tpu.memory_space<vmem>>, %arg5: memref<3x128xf32, #tpu.memory_space<vmem>>, %arg6: memref<100x128xf32, #tpu.memory_space<any>>, %arg7: memref<1x8x128xf32, #tpu.memory_space<vmem>>, %arg8: memref<8x128xf32, #tpu.memory_space<vmem>>, %arg9: memref<1x!tpu.dma_semaphore, #tpu.memory_space<semaphore_mem>>) attributes {dimension_semantics = [#tpu.dimension_semantics<parallel>, #tpu.dimension_semantics<parallel>], iteration_bounds = array<i64: 2, 2>, scalar_prefetch = 1 : i64, scratch_operands = 2 : i64, tpu.core_type = #tpu.core_type<tc>, window_params = [{transform_indices = @transform_0, window_bounds = array<i64: 8, 1>}, {transform_indices = @transform_1, window_bounds = array<i64: 8, 128>}, {pipeline_mode = #tpu.pipeline_mode<synchronous>, transform_indices = @transform_2, window_bounds = array<i64: 3, 128>}, {}, {transform_indices = @transform_4, window_bounds = array<i64: 1, 8, 128>}]} {
    %c2_i32 = arith.constant 2 : i32
    %0 = arith.muli %arg0, %c2_i32 : i32
    %1 = arith.addi %0, %arg1 : i32
    %c8_i32 = arith.constant 8 : i32
    %2 = arith.muli %1, %c8_i32 : i32
    %c0_i32 = arith.constant 0 : i32
    %c8_i32_0 = arith.constant 8 : i32
    %3 = arith.addi %c0_i32, %c8_i32_0 : i32
    %c1_i32 = arith.constant 1 : i32
    scf.for %arg10 = %c0_i32 to %3 step %c1_i32  : i32 {
      %45 = arith.addi %2, %arg10 : i32
      %46 = arith.index_cast %45 : i32 to index
      %47 = memref.load %arg2[%46] : memref<32xi32, #tpu.memory_space<smem>>
      %c0_i32_21 = arith.constant 0 : i32
      %c0_i32_22 = arith.constant 0 : i32
      %48 = tpu.memref_slice %arg6[%47, %c0_i32_22] : memref<100x128xf32, #tpu.memory_space<any>> -> memref<1x128xf32, #tpu.memory_space<any>>
      %49 = tpu.memref_squeeze %48 : memref<1x128xf32, #tpu.memory_space<any>> -> memref<128xf32, #tpu.memory_space<any>>
      %c0_i32_23 = arith.constant 0 : i32
      %50 = tpu.memref_slice %arg8[%arg10, %c0_i32_23] : memref<8x128xf32, #tpu.memory_space<vmem>> -> memref<1x128xf32, #tpu.memory_space<vmem>>
      %51 = tpu.memref_squeeze %50 : memref<1x128xf32, #tpu.memory_space<vmem>> -> memref<128xf32, #tpu.memory_space<vmem>>
      %52 = tpu.memref_slice %arg9[%c0_i32_21] : memref<1x!tpu.dma_semaphore, #tpu.memory_space<semaphore_mem>> -> memref<1x!tpu.dma_semaphore, #tpu.memory_space<semaphore_mem>>
      %53 = tpu.memref_squeeze %52 : memref<1x!tpu.dma_semaphore, #tpu.memory_space<semaphore_mem>> -> memref<!tpu.dma_semaphore, #tpu.memory_space<semaphore_mem>>
      tpu.enqueue_dma source(%49 : memref<128xf32, #tpu.memory_space<any>>) target(%51 : memref<128xf32, #tpu.memory_space<vmem>>) target_semaphore(%53 : memref<!tpu.dma_semaphore, #tpu.memory_space<semaphore_mem>>)
    }
    %c8_i32_1 = arith.constant 8 : i32
    %c0 = arith.constant 0 : index
    %c0_2 = arith.constant 0 : index
    %4 = vector.load %arg4[%c0, %c0_2] : memref<8x128xf32, #tpu.memory_space<vmem>>, vector<8x128xf32>
    %c0_3 = arith.constant 0 : index
    %c0_4 = arith.constant 0 : index
    %5 = vector.load %arg3[%c0_3, %c0_4] : memref<8x1xi32, #tpu.memory_space<vmem>>, vector<8x1xi32>
    %c0_i32_5 = arith.constant 0 : i32
    %6 = vector.broadcast %c0_i32_5 : i32 to vector<8x1xi32>
    %7 = arith.cmpi eq, %5, %6 : vector<8x1xi32>
    %8 = arith.extui %7 : vector<8x1xi1> to vector<8x1xi32>
    %9 = arith.sitofp %8 : vector<8x1xi32> to vector<8x1xf32>
    %c0_6 = arith.constant 0 : index
    %c0_7 = arith.constant 0 : index
    %10 = vector.load %arg5[%c0_6, %c0_7] : memref<3x128xf32, #tpu.memory_space<vmem>>, vector<1x128xf32>
    %11 = vector.shape_cast %10 : vector<1x128xf32> to vector<128xf32>
    %12 = vector.shape_cast %11 : vector<128xf32> to vector<1x128xf32>
    %13 = vector.broadcast %9 : vector<8x1xf32> to vector<8x128xf32>
    %14 = vector.broadcast %12 : vector<1x128xf32> to vector<8x128xf32>
    %15 = arith.mulf %13, %14 : vector<8x128xf32>
    %16 = arith.addf %4, %15 : vector<8x128xf32>
    %c1_i32_8 = arith.constant 1 : i32
    %17 = vector.broadcast %c1_i32_8 : i32 to vector<8x1xi32>
    %18 = arith.cmpi eq, %5, %17 : vector<8x1xi32>
    %19 = arith.extui %18 : vector<8x1xi1> to vector<8x1xi32>
    %20 = arith.sitofp %19 : vector<8x1xi32> to vector<8x1xf32>
    %c1 = arith.constant 1 : index
    %c0_9 = arith.constant 0 : index
    %21 = vector.load %arg5[%c1, %c0_9] : memref<3x128xf32, #tpu.memory_space<vmem>>, vector<1x128xf32>
    %22 = vector.shape_cast %21 : vector<1x128xf32> to vector<128xf32>
    %23 = vector.shape_cast %22 : vector<128xf32> to vector<1x128xf32>
    %24 = vector.broadcast %20 : vector<8x1xf32> to vector<8x128xf32>
    %25 = vector.broadcast %23 : vector<1x128xf32> to vector<8x128xf32>
    %26 = arith.mulf %24, %25 : vector<8x128xf32>
    %27 = arith.addf %16, %26 : vector<8x128xf32>
    %c2_i32_10 = arith.constant 2 : i32
    %28 = vector.broadcast %c2_i32_10 : i32 to vector<8x1xi32>
    %29 = arith.cmpi eq, %5, %28 : vector<8x1xi32>
    %30 = arith.extui %29 : vector<8x1xi1> to vector<8x1xi32>
    %31 = arith.sitofp %30 : vector<8x1xi32> to vector<8x1xf32>
    %c2 = arith.constant 2 : index
    %c0_11 = arith.constant 0 : index
    %32 = vector.load %arg5[%c2, %c0_11] : memref<3x128xf32, #tpu.memory_space<vmem>>, vector<1x128xf32>
    %33 = vector.shape_cast %32 : vector<1x128xf32> to vector<128xf32>
    %34 = vector.shape_cast %33 : vector<128xf32> to vector<1x128xf32>
    %35 = vector.broadcast %31 : vector<8x1xf32> to vector<8x128xf32>
    %36 = vector.broadcast %34 : vector<1x128xf32> to vector<8x128xf32>
    %37 = arith.mulf %35, %36 : vector<8x128xf32>
    %38 = arith.addf %27, %37 : vector<8x128xf32>
    %c0_i32_12 = arith.constant 0 : i32
    %c8_i32_13 = arith.constant 8 : i32
    %39 = arith.addi %c0_i32_12, %c8_i32_13 : i32
    %c1_i32_14 = arith.constant 1 : i32
    scf.for %arg10 = %c0_i32_12 to %39 step %c1_i32_14  : i32 {
      %c0_i32_21 = arith.constant 0 : i32
      %c0_i32_22 = arith.constant 0 : i32
      %c0_i32_23 = arith.constant 0 : i32
      %45 = tpu.memref_slice %arg6[%c0_i32_21, %c0_i32_23] : memref<100x128xf32, #tpu.memory_space<any>> -> memref<1x128xf32, #tpu.memory_space<any>>
      %46 = tpu.memref_squeeze %45 : memref<1x128xf32, #tpu.memory_space<any>> -> memref<128xf32, #tpu.memory_space<any>>
      %c0_i32_24 = arith.constant 0 : i32
      %47 = tpu.memref_slice %arg8[%arg10, %c0_i32_24] : memref<8x128xf32, #tpu.memory_space<vmem>> -> memref<1x128xf32, #tpu.memory_space<vmem>>
      %48 = tpu.memref_squeeze %47 : memref<1x128xf32, #tpu.memory_space<vmem>> -> memref<128xf32, #tpu.memory_space<vmem>>
      %49 = tpu.memref_slice %arg9[%c0_i32_22] : memref<1x!tpu.dma_semaphore, #tpu.memory_space<semaphore_mem>> -> memref<1x!tpu.dma_semaphore, #tpu.memory_space<semaphore_mem>>
      %50 = tpu.memref_squeeze %49 : memref<1x!tpu.dma_semaphore, #tpu.memory_space<semaphore_mem>> -> memref<!tpu.dma_semaphore, #tpu.memory_space<semaphore_mem>>
      tpu.wait_dma2 semaphore(%50 : memref<!tpu.dma_semaphore, #tpu.memory_space<semaphore_mem>>) src(%46 : memref<128xf32, #tpu.memory_space<any>>) dst(%48 : memref<128xf32, #tpu.memory_space<vmem>>)
    }
    %c8_i32_15 = arith.constant 8 : i32
    %c0_16 = arith.constant 0 : index
    %c0_17 = arith.constant 0 : index
    %40 = vector.load %arg8[%c0_16, %c0_17] : memref<8x128xf32, #tpu.memory_space<vmem>>, vector<8x128xf32>
    %41 = arith.addf %38, %40 : vector<8x128xf32>
    %c0_18 = arith.constant 0 : index
    %c0_19 = arith.constant 0 : index
    %c0_20 = arith.constant 0 : index
    %42 = vector.load %arg7[%c0_18, %c0_19, %c0_20] : memref<1x8x128xf32, #tpu.memory_space<vmem>>, vector<1x8x128xf32>
    %43 = vector.shape_cast %42 : vector<1x8x128xf32> to vector<8x128xf32>
    %44 = vector.shape_cast %41 : vector<8x128xf32> to vector<1x8x128xf32>
    tpu.vector_store %arg7[%c0_18, %c0_19, %c0_20], %44 {strides = array<i32>} : memref<1x8x128xf32, #tpu.memory_space<vmem>>, vector<1x8x128xf32>,
    return
  }
  func.func @transform_0(%arg0: i32, %arg1: i32, %arg2: memref<32xi32, #tpu.memory_space<smem>>) -> (i32, i32) {
    %c2_i32 = arith.constant 2 : i32
    %0 = arith.muli %arg0, %c2_i32 : i32
    %1 = arith.addi %0, %arg1 : i32
    %c0_i32 = arith.constant 0 : i32
    %c0_i32_0 = arith.constant 0 : i32
    return %1, %c0_i32 : i32, i32
  }
  func.func @transform_1(%arg0: i32, %arg1: i32, %arg2: memref<32xi32, #tpu.memory_space<smem>>) -> (i32, i32) {
    %c0_i32 = arith.constant 0 : i32
    %c0_i32_0 = arith.constant 0 : i32
    return %arg1, %c0_i32 : i32, i32
  }
  func.func @transform_2(%arg0: i32, %arg1: i32, %arg2: memref<32xi32, #tpu.memory_space<smem>>) -> (i32, i32) {
    %c0_i32 = arith.constant 0 : i32
    %c0_i32_0 = arith.constant 0 : i32
    %c0_i32_1 = arith.constant 0 : i32
    return %c0_i32, %c0_i32_0 : i32, i32
  }
  func.func @transform_4(%arg0: i32, %arg1: i32, %arg2: memref<32xi32, #tpu.memory_space<smem>>) -> (i32, i32, i32) {
    %c0_i32 = arith.constant 0 : i32
    %c0_i32_0 = arith.constant 0 : i32
    return %arg0, %arg1, %c0_i32 : i32, i32, i32
  }
}

</mosaic_0001>

<llo_original>
// kernel: tpu_custom_call.1
$region0: #{tpu_custom_call.1}
  #allocation0 [shape = 'u32[]', space=smem, size = 0x4, offset = 0x4, fixed_abs, tag = 'smem constant byte address 0x4 - core index']
  #allocation1 [shape = 'u32[72,128]{1,0:T(1,128)}', space=vmem, size = 0x9000, scoped, tag = 'internal scratch']
  #allocation2 [shape = 'f32[8,128]{1,0:T(8,128)}', space=vmem, size = 0x1000, scoped, tag = 'scratch operand']
  #allocation3 [shape = 's32[1]{0}', space=sflag, size = 0x4, scoped, tag = 'scratch operand']
  #allocation4 [shape = 's32[1]{0}', space=sflag, size = 0x4, scoped, tag = 'scoped memory for tpu_custom_call.1']
  #allocation5 [shape = 'u8[512]{0}', space=smem, size = 0x200, scoped, tag = 'prefetched SMEM operand 0']
  #allocation10 [shape = 's32[]', space=sflag, size = 0x4, offset = 0, fixed_abs, tag = 'sflag constant byte address 0x0 - dummy sync flag']
  #allocation11 [shape = 's32[]', space=sflag, size = 0x4, offset = 0, fixed_abs, tag = 'sflag constant byte address 0x0 - dummy sync flag']
  #allocation12 [shape = 'u32[]', space=smem, size = 0x4, offset = 0x44, fixed_abs, tag = 'smem constant byte address 0x44 - assertion arg 0']
  #allocation13 [shape = 'u32[]', space=smem, size = 0x4, offset = 0x48, fixed_abs, tag = 'smem constant byte address 0x48 - assertion arg 1']
  %s0 = inlined_call_operand.vmem [shape: s32[32], index: 0, kind: input, shape index: {}]
  %s1 = inlined_call_operand.vmem [shape: s32[32,1], index: 1, kind: input, shape index: {}]
  %s2 = inlined_call_operand.hbm [shape: f32[64,128], index: 2, kind: input, shape index: {}]
  %s3 = inlined_call_operand.vmem [shape: f32[3,128], index: 3, kind: input, shape index: {}]
  %s4 = inlined_call_operand.hbm [shape: f32[100,128], index: 4, kind: input, shape index: {}]
  %s5 = inlined_call_operand.hbm [shape: f32[2,16,128], index: 5, kind: output, shape index: {}]
  %s6 = sld [smem:[#allocation0]]
  $region67: #{tpu_custom_call.1} parent=0
    _
  %s8 = ssub.s32 1, %s6
  %s9 = scalar_select 0, %s8, %s6
  %s11 = sshll.u32 %s0, 4
  %s12 = int_to_ptr.vmem [resolvable:$true] %s11
  %14 = dma.vmem_to_smem %s12, 16, [#allocation5], [#allocation4]
  %16 = dma.done [#allocation4], 16
  %17 = sfence
  $region1: #{tpu_custom_call.1} parent=0
    #allocation6 [shape = 'u8[8192]{0}', space=vmem, size = 0x2000, scoped, tag = 'input window, operand 2']
    #allocation7 [shape = 's32[2]{0}', space=sflag, size = 0x8, scoped, tag = 'scoped memory for tpu_custom_call.1']
    #allocation8 [shape = 's32[2]{0}', space=sflag, size = 0x8, scoped, tag = 'scoped memory for tpu_custom_call.1']
    #allocation9 [shape = 'u8[8192]{0}', space=vmem, size = 0x2000, scoped, tag = 'output window, operand 0']
    %18 = vsyncpa [#allocation7], 0
    %s19 = scalar_lea.sflag [#allocation7], 1
    %20 = vsyncpa %s19, 0
    %21 = vsyncpa [#allocation8], 0
    %s22 = scalar_lea.sflag [#allocation8], 1
    %23 = vsyncpa %s22, 0
    loop: start=0, step=1, limit=6
    $region2: #{tpu_custom_call.1} parent=1 // loop_pre_header
      _
    $region3: #{tpu_custom_call.1} parent=1 // loop_header
      %s25 = sphi 0, %s29
      %p26 = scmp.ge.s32.totalorder %s25, 6
      %s32 = sphi 0, %s44
      %s33 = sphi 0, %s40
      %s34 = sphi 0, %s32
      %s35 = sphi 0, %s33
      %s36 = sphi 0, %s34
      %s37 = sphi 0, %s35
      %s51 = sphi 0, %s53
      %s54 = sphi 0, %s51
      %s55 = sphi 0, %s54
      %s71 = sphi 0, %s55
      %s77 = sphi 0, %s79
      %s80 = sphi 0, %s77
      %s81 = sphi 0, %s80
      %s97 = sphi 0, %s81
      %s101 = sphi 0, %s101
      %s103 = sphi 0, %s101
      %s104 = sphi 0, %s103
      %s118 = sphi 0, %s104
      %s126 = sphi 0, %s128
      %s129 = sphi 0, %s126
      %s130 = sphi 0, %s129
      %s146 = sphi 0, %s130
    $region4: #{tpu_custom_call.1} parent=1 // loop_header_branch
      %28 = sbr.rel (%p26) target = $region8
    $region5: #{tpu_custom_call.1} parent=1 // loop_body
      %s30 = ssub.s32 %s25, 1
      %s31 = ssub.s32 %s25, 2
      %s38 = sadd.s32 1, %s33
      %p39 = scmp.ge.s32.totalorder %s38, 2
      %s40 = scalar_select %p39, 0, %s38
      %s41 = sadd.s32 1, %s32
      %s42 = scalar_select %p39, %s41, %s32
      %p43 = scmp.ge.s32.totalorder %s42, 2
      %s44 = scalar_select %p43, 0, %s42
      %s45 = smul.u32 %s32, 2
      %s46 = sadd.s32 %s45, %s33
      %s47 = smul.u32 %s44, 2
      %s48 = sadd.s32 %s47, %s40
      %s49 = ssub.s32 %s46, %s48
      %p50 = scmp.eq.s32.totalorder %s49, 0
      %s52 = sadd.s32 %s51, 1
      %s53 = scalar_select %p50, %s51, %s52
      %p56 = pneg %p50
      %p57 = scmp.eq.s32.totalorder %s25, 3
      %p58 = por %p56, %p57
      %p59 = scmp.ne.s32.totalorder %s51, %s54
      %p60 = scmp.eq.s32.totalorder %s25, 0
      %p61 = por %p59, %p60
      %p62 = scmp.ne.s32.totalorder %s51, %s54
      %p63 = scmp.eq.s32.totalorder %s30, 3
      %p64 = por %p62, %p63
      %p65 = scmp.ne.s32.totalorder %s54, %s55
      %p66 = scmp.eq.s32.totalorder %s30, 0
      %p67 = por %p65, %p66
      %p68 = scmp.ne.s32.totalorder %s54, %s55
      %p69 = scmp.eq.s32.totalorder %s31, 3
      %p70 = por %p68, %p69
      %p72 = scmp.ne.s32.totalorder %s55, %s71
      %p73 = scmp.eq.s32.totalorder %s31, 0
      %p74 = por %p72, %p73
      %s75 = ssub.s32 %s33, %s40
      %p76 = scmp.eq.s32.totalorder %s75, 0
      %s78 = sadd.s32 %s77, 1
      %s79 = scalar_select %p76, %s77, %s78
      %p82 = pneg %p76
      %p83 = scmp.eq.s32.totalorder %s25, 3
      %p84 = por %p82, %p83
      %p85 = scmp.ne.s32.totalorder %s77, %s80
      %p86 = scmp.eq.s32.totalorder %s25, 0
      %p87 = por %p85, %p86
      %p88 = scmp.ne.s32.totalorder %s77, %s80
      %p89 = scmp.eq.s32.totalorder %s30, 3
      %p90 = por %p88, %p89
      %p91 = scmp.ne.s32.totalorder %s80, %s81
      %p92 = scmp.eq.s32.totalorder %s30, 0
      %p93 = por %p91, %p92
      %p94 = scmp.ne.s32.totalorder %s80, %s81
      %p95 = scmp.eq.s32.totalorder %s31, 3
      %p96 = por %p94, %p95
      %p98 = scmp.ne.s32.totalorder %s81, %s97
      %p99 = scmp.eq.s32.totalorder %s31, 0
      %p100 = por %p98, %p99
      %s102 = sadd.s32 %s101, 1
      %p105 = scmp.eq.s32.totalorder %s25, 3
      %p106 = scmp.ne.s32.totalorder %s101, %s103
      %p107 = scmp.eq.s32.totalorder %s25, 0
      %p108 = por %p106, %p107
      %p109 = scmp.ne.s32.totalorder %s101, %s103
      %p110 = scmp.eq.s32.totalorder %s30, 3
      %p111 = por %p109, %p110
      %p112 = scmp.ne.s32.totalorder %s103, %s104
      %p113 = scmp.eq.s32.totalorder %s30, 0
      %p114 = por %p112, %p113
      %p115 = scmp.ne.s32.totalorder %s103, %s104
      %p116 = scmp.eq.s32.totalorder %s31, 3
      %p117 = por %p115, %p116
      %p119 = scmp.ne.s32.totalorder %s104, %s118
      %p120 = scmp.eq.s32.totalorder %s31, 0
      %p121 = por %p119, %p120
      %s122 = ssub.s32 %s32, %s44
      %s123 = ssub.s32 %s33, %s40
      %s124 = sor.u32 %s122, %s123
      %p125 = scmp.eq.s32.totalorder %s124, 0
      %s127 = sadd.s32 %s126, 1
      %s128 = scalar_select %p125, %s126, %s127
      %p131 = pneg %p125
      %p132 = scmp.eq.s32.totalorder %s25, 3
      %p133 = por %p131, %p132
      %p134 = scmp.ne.s32.totalorder %s126, %s129
      %p135 = scmp.eq.s32.totalorder %s25, 0
      %p136 = por %p134, %p135
      %p137 = scmp.ne.s32.totalorder %s126, %s129
      %p138 = scmp.eq.s32.totalorder %s30, 3
      %p139 = por %p137, %p138
      %p140 = scmp.ne.s32.totalorder %s129, %s130
      %p141 = scmp.eq.s32.totalorder %s30, 0
      %p142 = por %p140, %p141
      %p143 = scmp.ne.s32.totalorder %s129, %s130
      %p144 = scmp.eq.s32.totalorder %s31, 3
      %p145 = por %p143, %p144
      %p147 = scmp.ne.s32.totalorder %s130, %s146
      %p148 = scmp.eq.s32.totalorder %s31, 0
      %p149 = por %p147, %p148
      %p150 = scmp.le.s32.totalorder 1, %s25
      %p151 = scmp.lt.s32.totalorder %s25, 5
      %p152 = pnand %p150, %p151
      %p153 = pneg %p152
      // Predicated region
      $region9: #{tpu_custom_call.1} parent=5 // pred_check
        _
      $region10: #{tpu_custom_call.1} parent=5 // pred_check_branch
        %155 = sbr.rel (%p152) target = $region12
      $region11: #{tpu_custom_call.1} parent=5 // pred_region
        %s156 = ssub.s32 %s25, 1
        // Predicated region
        $region13: #{tpu_custom_call.1} parent=11 // pred_check
          %p157 = pneg %p114
        $region14: #{tpu_custom_call.1} parent=11 // pred_check_branch
          %159 = sbr.rel (%p157) target = $region16
        $region15: #{tpu_custom_call.1} parent=11 // pred_region
          _
        $region16: #{tpu_custom_call.1} parent=11 // pred_fallthru
          _
      $region12: #{tpu_custom_call.1} parent=5 // pred_fallthru
        _
      %p160 = scmp.lt.s32.totalorder %s25, 4
      // Predicated region
      $region17: #{tpu_custom_call.1} parent=5 // pred_check
        %p161 = pneg %p160
      $region18: #{tpu_custom_call.1} parent=5 // pred_check_branch
        %163 = sbr.rel (%p161) target = $region20
      $region19: #{tpu_custom_call.1} parent=5 // pred_region
        // Predicated region
        $region21: #{tpu_custom_call.1} parent=19 // pred_check
          %p164 = pneg %p61
        $region22: #{tpu_custom_call.1} parent=19 // pred_check_branch
          %166 = sbr.rel (%p164) target = $region24
        $region23: #{tpu_custom_call.1} parent=19 // pred_region
          %s167 = smul.u32 %s32, 2
          %s168 = sadd.s32 %s167, %s33
          %p169 = scmp.lt.s32.totalorder %s168, 3
          %s170 = scalar_select %p169, %s168, 3
          %s171 = smul.addr %s170, 8
          %s172 = scalar_lea.vmem %s1, %s171
          %s173 = smul.u32 %s32, 2
          %s174 = sadd.s32 %s173, %s33
        $region24: #{tpu_custom_call.1} parent=19 // pred_fallthru
          _
        // Predicated region
        $region25: #{tpu_custom_call.1} parent=19 // pred_check
          %p175 = pneg %p87
        $region26: #{tpu_custom_call.1} parent=19 // pred_check_branch
          %177 = sbr.rel (%p175) target = $region28
        $region27: #{tpu_custom_call.1} parent=19 // pred_region
          %s178 = sand.u32 %s77, 1
          %s179 = scalar_lea.sflag [#allocation7], %s178
          %s180 = sand.u32 %s77, 1
          %s181 = smul.addr %s180, 8
          %s182 = scalar_lea.vmem [#allocation6], %s181
          %184 = vsyncadd %s179, 0
          %s185 = smul.addr %s33, 8
          %s186 = scalar_lea.hbm %s2, %s185
          %s188 = sshll.u32 %s186, 4
          %s189 = int_to_ptr.hbm [resolvable:$true] %s188
          %s190 = sshll.u32 %s182, 4
          %s191 = int_to_ptr.vmem [resolvable:$true] %s190
          %193 = dma.hbm_to_vmem [thread:$0]  %s189, 128, %s191, %s179
        $region28: #{tpu_custom_call.1} parent=19 // pred_fallthru
          _
      $region20: #{tpu_custom_call.1} parent=5 // pred_fallthru
        _
      %p194 = scmp.le.s32.totalorder 1, %s25
      %p195 = scmp.lt.s32.totalorder %s25, 5
      %p196 = pnand %p194, %p195
      %p197 = pneg %p196
      // Predicated region
      $region29: #{tpu_custom_call.1} parent=5 // pred_check
        _
      $region30: #{tpu_custom_call.1} parent=5 // pred_check_branch
        %199 = sbr.rel (%p196) target = $region32
      $region31: #{tpu_custom_call.1} parent=5 // pred_region
        %s200 = ssub.s32 %s25, 1
        %s201 = sand.u32 %s80, 1
        %s202 = scalar_lea.sflag [#allocation7], %s201
        %s203 = sand.u32 %s80, 1
        %s204 = smul.addr %s203, 8
        %s205 = scalar_lea.vmem [#allocation6], %s204
        // Predicated region
        $region33: #{tpu_custom_call.1} parent=31 // pred_check
          %p206 = pneg %p93
        $region34: #{tpu_custom_call.1} parent=31 // pred_check_branch
          %208 = sbr.rel (%p206) target = $region36
        $region35: #{tpu_custom_call.1} parent=31 // pred_region
          %210 = dma.done %s202, 128
        $region36: #{tpu_custom_call.1} parent=31 // pred_fallthru
          _
        %s211 = smul.u32 %s34, 2
        %s212 = sadd.s32 %s211, %s35
        %p213 = scmp.lt.s32.totalorder %s212, 3
        %s214 = scalar_select %p213, %s212, 3
        %s215 = smul.addr %s214, 8
        %s216 = scalar_lea.vmem %s1, %s215
        %p217 = pneg %p67
        %p218 = pneg %p64
        %s219 = sand.u32 %s80, 1
        %s220 = scalar_lea.sflag [#allocation7], %s219
        %s221 = sand.u32 %s80, 1
        %s222 = smul.addr %s221, 8
        %s223 = scalar_lea.vmem [#allocation6], %s222
        %p224 = pneg %p93
        %p225 = pneg %p90
        %p226 = pneg %p114
        %p227 = pneg %p111
        %p228 = pneg %p142
        %p229 = pneg %p139
        %s230 = sand.u32 %s129, 1
        %s231 = scalar_lea.sflag [#allocation8], %s230
        %s232 = sand.u32 %s129, 1
        %s233 = smul.addr %s232, 8
        %s234 = scalar_lea.vmem [#allocation9], %s233
        %s235 = smul.u32 %s34, 2
        %s236 = sadd.s32 %s235, %s35
        %p237 = scmp.lt.s32.totalorder %s236, 3
        %s238 = scalar_select %p237, %s236, 3
        %s239 = smul.addr %s238, 8
        %s240 = scalar_lea.vmem %s1, %s239
        %s241 = smul.u32 %s34, 2
        %s242 = sadd.s32 %s241, %s35
        %s243 = smul.u32 %s34, 2
        %s244 = sadd.s32 %s243, %s35
        %s245 = smul.u32 %s244, 8
        loop: start=0, step=1, limit=8
        $region37: #{tpu_custom_call.1} parent=31 // loop_pre_header
          _
        $region38: #{tpu_custom_call.1} parent=31 // loop_header
          %s247 = sphi 0, %s251
          %p248 = scmp.ge.s32.totalorder %s247, 8
        $region39: #{tpu_custom_call.1} parent=31 // loop_header_branch
          %250 = sbr.rel (%p248) target = $region43
        $region40: #{tpu_custom_call.1} parent=31 // loop_body
          %s252 = sadd.s32 %s245, %s247
          %s253 = sld [smem:[#allocation5 + %s252]]
          %s254 = scalar_lea.hbm %s4, %s253
          %s255 = scalar_lea.vmem [#allocation2], %s247
          // Predicated region
          $region44: #{tpu_custom_call.1} parent=40 // pred_check
            _
          $region45: #{tpu_custom_call.1} parent=40 // pred_check_branch
            %257 = sbr.rel target = $region47
          $region46: #{tpu_custom_call.1} parent=40 // pred_region
            %258 = sst [smem:[#allocation12]] [#allocation11]
            %259 = sst [smem:[#allocation13]] [#allocation10]
          $region47: #{tpu_custom_call.1} parent=40 // pred_fallthru
            _
          %261 = shalt.err (0)
          %s263 = sshll.u32 %s254, 4
          %s264 = int_to_ptr.hbm [resolvable:$true] %s263
          %s265 = sshll.u32 %s255, 4
          %s266 = int_to_ptr.vmem [resolvable:$true] %s265
          %268 = dma.hbm_to_vmem [thread:$0]  %s264, 16, %s266, [#allocation3]
        $region41: #{tpu_custom_call.1} parent=31 // loop_footer
          %s251 = sadd.s32 1, %s247
        $region42: #{tpu_custom_call.1} parent=31 // loop_footer_branch
          %246 = sbr.rel target = $region38
        $region43: #{tpu_custom_call.1} parent=31 // loop_exit
          _
        %v269 = vld [vmem:[%s205] sm:$0xff]
        %v270 = vld [vmem:[%s240] sm:$0xff]
        %vm271 = vcmp.eq.s32.totalorder %v270, 0
        %v272 = vsel %vm271, 1, 0
        %v273 = vcvt.s32.f32 %v272
        %v274 = vld [vmem:[%s3] sm:$0x1]
        %276 = vset.pattern.permute.xlu0 0
        %277 = vperm.xlu0 %276, %v273
        %v278 = vpop.permute.xlu0 %277
        %v280 = vperm.slane %v274, 0
        %v281 = vmul.f32 %v278, %v280
        %v282 = vadd.f32 %v269, %v281
        %vm283 = vcmp.eq.s32.totalorder %v270, 1
        %v284 = vsel %vm283, 1, 0
        %v285 = vcvt.s32.f32 %v284
        %v286 = vld [vmem:[%s3 + $0x1] sm:$0x1]
        %288 = vset.pattern.permute.xlu0 0
        %289 = vperm.xlu0 %288, %v285
        %v290 = vpop.permute.xlu0 %289
        %v292 = vperm.slane %v286, 0
        %v293 = vmul.f32 %v290, %v292
        %v294 = vadd.f32 %v282, %v293
        %vm295 = vcmp.eq.s32.totalorder %v270, 2
        %v296 = vsel %vm295, 1, 0
        %v297 = vcvt.s32.f32 %v296
        %v298 = vld [vmem:[%s3 + $0x2] sm:$0x1]
        %300 = vset.pattern.permute.xlu0 0
        %301 = vperm.xlu0 %300, %v297
        %v302 = vpop.permute.xlu0 %301
        %v304 = vperm.slane %v298, 0
        %v305 = vmul.f32 %v302, %v304
        %v306 = vadd.f32 %v294, %v305
        loop: start=0, step=1, limit=8
        $region48: #{tpu_custom_call.1} parent=31 // loop_pre_header
          _
        $region49: #{tpu_custom_call.1} parent=31 // loop_header
          %s308 = sphi 0, %s312
          %p309 = scmp.ge.s32.totalorder %s308, 8
        $region50: #{tpu_custom_call.1} parent=31 // loop_header_branch
          %311 = sbr.rel (%p309) target = $region54
        $region51: #{tpu_custom_call.1} parent=31 // loop_body
          %314 = dma.done [#allocation3], 16
        $region52: #{tpu_custom_call.1} parent=31 // loop_footer
          %s312 = sadd.s32 1, %s308
        $region53: #{tpu_custom_call.1} parent=31 // loop_footer_branch
          %307 = sbr.rel target = $region49
        $region54: #{tpu_custom_call.1} parent=31 // loop_exit
          _
        %v315 = vld [vmem:[#allocation2] sm:$0xff]
        %v316 = vadd.f32 %v306, %v315
        %317 = vst [vmem:[%s234] sm:$0xff] %v316
        %s318 = sand.u32 %s129, 1
        %s319 = scalar_lea.sflag [#allocation8], %s318
        %s320 = sand.u32 %s129, 1
        %s321 = smul.addr %s320, 8
        %s322 = scalar_lea.vmem [#allocation9], %s321
        // Predicated region
        $region55: #{tpu_custom_call.1} parent=31 // pred_check
          %p323 = pneg %p139
        $region56: #{tpu_custom_call.1} parent=31 // pred_check_branch
          %325 = sbr.rel (%p323) target = $region58
        $region57: #{tpu_custom_call.1} parent=31 // pred_region
          %327 = vsyncadd %s319, 0
          %s328 = smul.addr %s34, 2
          %s329 = sadd.s32 %s35, %s328
          %s330 = smul.addr %s329, 8
          %s331 = scalar_lea.hbm %s5, %s330
          %s333 = sshll.u32 %s322, 4
          %s334 = int_to_ptr.vmem [resolvable:$true] %s333
          %s335 = sshll.u32 %s331, 4
          %s336 = int_to_ptr.hbm [resolvable:$true] %s335
          %338 = dma.vmem_to_hbm [thread:$0]  %s334, 128, %s336, %s319
        $region58: #{tpu_custom_call.1} parent=31 // pred_fallthru
          _
      $region32: #{tpu_custom_call.1} parent=5 // pred_fallthru
        _
      %p339 = scmp.le.s32.totalorder 2, %s25
      // Predicated region
      $region59: #{tpu_custom_call.1} parent=5 // pred_check
        %p340 = pneg %p339
      $region60: #{tpu_custom_call.1} parent=5 // pred_check_branch
        %342 = sbr.rel (%p340) target = $region62
      $region61: #{tpu_custom_call.1} parent=5 // pred_region
        %s343 = ssub.s32 %s25, 2
        // Predicated region
        $region63: #{tpu_custom_call.1} parent=61 // pred_check
          %p344 = pneg %p145
        $region64: #{tpu_custom_call.1} parent=61 // pred_check_branch
          %346 = sbr.rel (%p344) target = $region66
        $region65: #{tpu_custom_call.1} parent=61 // pred_region
          %s347 = sand.u32 %s130, 1
          %s348 = scalar_lea.sflag [#allocation8], %s347
          %s349 = sand.u32 %s130, 1
          %s350 = smul.addr %s349, 8
          %s351 = scalar_lea.vmem [#allocation9], %s350
          %353 = dma.done %s348, 128
        $region66: #{tpu_custom_call.1} parent=61 // pred_fallthru
          _
      $region62: #{tpu_custom_call.1} parent=5 // pred_fallthru
        _
    $region6: #{tpu_custom_call.1} parent=1 // loop_footer
      %s29 = sadd.s32 1, %s25
    $region7: #{tpu_custom_call.1} parent=1 // loop_footer_branch
      %24 = sbr.rel target = $region3
    $region8: #{tpu_custom_call.1} parent=1 // loop_exit
      _
    %354 = vsyncpa [#allocation7], 1
    %s355 = scalar_lea.sflag [#allocation7], 1
    %356 = vsyncpa %s355, 1
    %357 = vsyncpa [#allocation8], 1
    %s358 = scalar_lea.sflag [#allocation8], 1
    %359 = vsyncpa %s358, 1
  %360 = vsyncmov [#allocation3]
  %s361 = vpop.sfrf %360
  %p362 = scmp.eq.s32.totalorder %s361, 0
  %p363 = pneg %p362
  %365 = shalt.err (%p363)

</llo_original>
